<compile_context>
chip_gen: v6e
topology: v6e:2x2x1
jax: 0.10.0
libtpu: 0.0.40
codegen_flags: <defaults>
</compile_context>

<pallas_src>
import functools

import jax
import jax.numpy as jnp
from jax import lax
from jax.experimental import pallas as pl
from jax.experimental.pallas import tpu as pltpu


def _cdiv(a, b):
    return (a + b - 1) // b


def _round_up(x, m):
    return _cdiv(x, m) * m


def _spec(block_shape, index_map, *, buffers=None):
    """BlockSpec, optionally with an explicit buffer count (pl.Buffered).

    Falls back to a plain BlockSpec if the installed jax has no pipeline_mode
    support, so the kernel always compiles."""
    if buffers is not None and hasattr(pl, "Buffered"):
        try:
            return pl.BlockSpec(block_shape, index_map,
                                pipeline_mode=pl.Buffered(buffers))
        except TypeError:
            pass
    return pl.BlockSpec(block_shape, index_map)


def _erf(x):
    # Abramowitz & Stegun 7.1.26 polynomial erf (|err| < 1.5e-7), built only from
    # ops that lower cleanly in Mosaic.  Divide goes to the EUP (approx reciprocal)
    # alongside the exp, keeping the VALU free for the polynomial FMAs.
    a1, a2, a3, a4, a5 = 0.254829592, -0.284496736, 1.421413741, -1.453152027, 1.061405429
    p = 0.3275911
    sign = jnp.where(x >= 0.0, 1.0, -1.0)
    ax = jnp.abs(x)
    t = pl.reciprocal(1.0 + p * ax, approx=True)
    poly = ((((a5 * t + a4) * t + a3) * t + a2) * t + a1) * t
    return sign * (1.0 - poly * jnp.exp(-ax * ax))


def _gelu_exact(x):
    # Exact (erf-based) GELU, matching nn.GELU() default (approximate='none').
    return 0.5 * x * (1.0 + _erf(x * 0.7071067811865476))


def _mlp_projector_kernel(x_ref, w1_ref, b1_ref, w2_ref, b2_ref, g_ref, beta_ref,
                          o_ref, h_ref, *, cdim, tokens_per_tile, eps):
    # Grid = (batch_tile i [parallel], token/column tile n [arbitrary]).
    #   x_ref:    (TB, F)        compute-dtype batch tile (constant across n)
    #   w1_ref:   (F, H)         compute-dtype, grid-invariant, single-buffered
    #   b1_ref:   (1, H)         f32, grid-invariant, single-buffered
    #   w2_ref:   (H, tile_n)    compute-dtype column tile of W2 (streamed over n)
    #   b2_ref:   (1, tile_n)    f32 column tile of b2
    #   g_ref:    (1, C)  f32    layernorm gamma (grid-invariant)
    #   beta_ref: (1, C)  f32    layernorm beta  (grid-invariant)
    #   o_ref:    (TB, tile_n)   lane-dense output tile
    #   h_ref:    (TB, H)        VMEM scratch: GELU(x @ W1 + b1), compute dtype
    n = pl.program_id(1)

    # Hidden activation: computed once per batch tile (first column tile only),
    # stored in the matmul compute dtype so every later step is MXU-ready.
    @pl.when(n == 0)
    def _():
        h = jnp.dot(x_ref[...], w1_ref[...], preferred_element_type=jnp.float32)
        h = h + b1_ref[...]
        h = _gelu_exact(h)
        h_ref[...] = h.astype(h_ref.dtype)

    # Second Linear on this column tile (bf16 MXU path, f32 accumulate).
    y = jnp.dot(h_ref[...], w2_ref[...], preferred_element_type=jnp.float32)
    y = y + b2_ref[...]                                   # (TB, tile_n) f32

    tb = y.shape[0]
    if tokens_per_tile > 1:
        # TODO(synk): fallback relayout used only when cross_attention_dim is not a
        # multiple of 128; the hot path (C % 128 == 0) is reshape-free.
        y = y.reshape(tb * tokens_per_tile, cdim)

    # FP32 LayerNorm over the channel dim (lane dim of this tile).
    mu = jnp.mean(y, axis=-1, keepdims=True)
    var = jnp.mean((y - mu) * (y - mu), axis=-1, keepdims=True)
    out = (y - mu) * lax.rsqrt(var + eps) * g_ref[...] + beta_ref[...]

    if tokens_per_tile > 1:
        out = out.reshape(tb, tokens_per_tile * cdim)
    o_ref[...] = out.astype(o_ref.dtype)


def prepare_params(w1_torch, b1, w2_torch, b2, ln_weight, ln_bias,
                   *, compute_dtype=jnp.bfloat16):
    """One-time (parameter-load time) prep: transpose PyTorch (out, in) weights to
    (in, out) layout and cast to the matmul compute dtype, so the hot path never
    pays an HBM transpose or an in-kernel full-weight cast."""
    return (w1_torch.T.astype(compute_dtype), b1,
            w2_torch.T.astype(compute_dtype), b2,
            ln_weight, ln_bias)


def mlp_image_projector(features, w1, b1, w2, b2, ln_weight, ln_bias,
                        *, num_style_tokens, cross_attention_dim, eps=1e-5,
                        block_b=None, compute_dtype=jnp.bfloat16, out_dtype=None):
    """features: [B, F]; w1: [F, H] ((in,out) layout); b1: [H]; w2: [H, T*C];
    b2: [T*C]; ln_weight/ln_bias: [C].  Returns [B, T, C] in out_dtype
    (default: features.dtype)."""
    B, F = features.shape
    T, C = num_style_tokens, cross_attention_dim
    TC = T * C
    H = w1.shape[1]
    assert w1.shape == (F, H) and w2.shape == (H, TC)
    assert b1.shape == (H,) and b2.shape == (TC,)
    assert ln_weight.shape == (C,) and ln_bias.shape == (C,)

    out_dtype = features.dtype if out_dtype is None else out_dtype

    # --- batch tiling: <= 256 rows/tile, minimal padding, and >= 2 tiles when
    # B > 8 so the "parallel" axis can be split across v7x's two TensorCores.
    if block_b is None:
        n_btiles = max(_cdiv(B, 256), 2 if B > 8 else 1)
        block_b = min(256, _round_up(_cdiv(B, n_btiles), 8))
    B_pad = _round_up(B, block_b)
    grid_b = B_pad // block_b

    # --- token/column tiling of the second matmul.  tile_n = C keeps LayerNorm on
    # a lane-dense (block_b, C) tile with no reshape; requires C % 128 == 0 (true
    # for real IP-Adapter dims).  Otherwise fall back to a single full-width tile.
    if C % 128 == 0:
        tokens_per_tile = 1
    else:
        tokens_per_tile = T
    tile_n = tokens_per_tile * C
    n_tiles = T // tokens_per_tile

    itemsize_cd = jnp.dtype(compute_dtype).itemsize
    itemsize_out = jnp.dtype(out_dtype).itemsize

    x = features.astype(compute_dtype)
    if B_pad != B:
        x = jnp.pad(x, ((0, B_pad - B), (0, 0)))

    w1c = w1.astype(compute_dtype)          # no-op if prepared already
    w2c = w2.astype(compute_dtype)
    b1_2 = b1.reshape(1, H).astype(jnp.float32)
    b2_2 = b2.reshape(1, TC).astype(jnp.float32)
    g2 = ln_weight.reshape(1, C).astype(jnp.float32)
    be2 = ln_bias.reshape(1, C).astype(jnp.float32)

    in_specs = [
        _spec((block_b, F), lambda i, n: (i, 0)),              # batch tile of x
        _spec((F, H), lambda i, n: (0, 0), buffers=1),          # W1, resident (1 buf)
        _spec((1, H), lambda i, n: (0, 0), buffers=1),          # b1, resident (1 buf)
        _spec((H, tile_n), lambda i, n: (0, n)),                # W2 column tile (streamed)
        _spec((1, tile_n), lambda i, n: (0, n)),                # b2 column tile
        _spec((1, C), lambda i, n: (0, 0), buffers=1),          # LN gamma (1 buf)
        _spec((1, C), lambda i, n: (0, 0), buffers=1),          # LN beta  (1 buf)
    ]
    out_spec = pl.BlockSpec((block_b, tile_n), lambda i, n: (i, n))

    # --- explicit scoped-VMEM budget from the actual block sizes (+ headroom),
    # clamped to a ceiling that is safe on v7x (64 MiB physical VMEM).
    need = (2 * block_b * F * itemsize_cd          # x tile (double-buffered)
            + F * H * itemsize_cd                  # W1 (single-buffered)
            + H * 4 + 2 * tile_n * 4 + 2 * C * 4   # b1 / b2 tiles / gamma / beta
            + 2 * H * tile_n * itemsize_cd         # W2 tile (double-buffered)
            + 2 * block_b * tile_n * itemsize_out  # output tile (double-buffered)
            + block_b * H * itemsize_cd            # h scratch
            + 2 * block_b * tile_n * 4)            # in-flight f32 y / LN temporaries
    vmem_limit = int(max(32 << 20, min(need + (need >> 1) + (8 << 20), 56 << 20)))

    cost = pl.CostEstimate(
        flops=int(2 * B_pad * (F * H + H * TC) + 8 * B_pad * TC),
        transcendentals=int(B_pad * H),
        bytes_accessed=int(B_pad * F * itemsize_cd
                           + F * H * itemsize_cd
                           + grid_b * H * TC * itemsize_cd
                           + B_pad * TC * itemsize_out
                           + (H + TC + 2 * C) * 4))

    kernel = functools.partial(_mlp_projector_kernel, cdim=C,
                               tokens_per_tile=tokens_per_tile, eps=eps)

    out_flat = pl.pallas_call(
        kernel,
        out_shape=jax.ShapeDtypeStruct((B_pad, TC), out_dtype),
        grid_spec=pltpu.PrefetchScalarGridSpec(
            num_scalar_prefetch=0,
            grid=(grid_b, n_tiles),
            in_specs=in_specs,
            out_specs=out_spec,
            scratch_shapes=[pltpu.VMEM((block_b, H), compute_dtype)]),
        compiler_params=pltpu.CompilerParams(
            dimension_semantics=("parallel", "arbitrary"),
            vmem_limit_bytes=vmem_limit),
        cost_estimate=cost,
    )(x, w1c, b1_2, w2c, b2_2, g2, be2)

    return out_flat[:B].reshape(B, T, C)


def _reference(features, w1, b1, w2, b2, ln_weight, ln_bias,
               *, T, C, eps=1e-5, compute_dtype=jnp.bfloat16):
    """Plain-JAX reference using the same mixed precision as the kernel."""
    x = features.astype(compute_dtype)
    h = jnp.dot(x, w1.astype(compute_dtype),
                preferred_element_type=jnp.float32) + b1.astype(jnp.float32)
    h = jax.nn.gelu(h, approximate=False)
    y = jnp.dot(h.astype(compute_dtype), w2.astype(compute_dtype),
                preferred_element_type=jnp.float32) + b2.astype(jnp.float32)
    y = y.reshape(-1, T, C)
    mu = jnp.mean(y, axis=-1, keepdims=True)
    var = jnp.mean((y - mu) ** 2, axis=-1, keepdims=True)
    yn = (y - mu) * lax.rsqrt(var + eps)
    return (yn * ln_weight.astype(jnp.float32)
            + ln_bias.astype(jnp.float32)).astype(features.dtype)


if __name__ == "__main__":
    # Small shapes consistent with the module's forward.
    B = 8
    in_features = 32
    mlp_ratio = 1.0
    hidden = int(in_features * mlp_ratio)
    cross_attention_dim = 256
    num_style_tokens = 4

    key = jax.random.PRNGKey(0)
    k_feat, k_w1, k_w2 = jax.random.split(key, 3)

    features = jax.random.normal(k_feat, (B, in_features), dtype=jnp.float32)

    # Params mirroring init_weights(): weights ~ N(0, 0.02), biases zero,
    # norm.weight = 1, norm.bias = 0.  PyTorch Linear layout = (out, in).
    w1_torch = 0.02 * jax.random.normal(k_w1, (hidden, in_features), dtype=jnp.float32)
    b1 = jnp.zeros((hidden,), jnp.float32)
    w2_torch = 0.02 * jax.random.normal(
        k_w2, (cross_attention_dim * num_style_tokens, hidden), dtype=jnp.float32)
    b2 = jnp.zeros((cross_attention_dim * num_style_tokens,), jnp.float32)
    ln_weight = jnp.ones((cross_attention_dim,), jnp.float32)
    ln_bias = jnp.zeros((cross_attention_dim,), jnp.float32)

    # One-time parameter prep (transpose to (in, out) + bf16 cast).
    w1, b1, w2, b2, ln_weight, ln_bias = prepare_params(
        w1_torch, b1, w2_torch, b2, ln_weight, ln_bias,
        compute_dtype=jnp.bfloat16)

    # --- run 1: default config (f32 output, same dtype as the module returns) ---
    out = mlp_image_projector(
        features, w1, b1, w2, b2, ln_weight, ln_bias,
        num_style_tokens=num_style_tokens,
        cross_attention_dim=cross_attention_dim)
    out = jax.block_until_ready(out)
    ref = _reference(features, w1, b1, w2, b2, ln_weight, ln_bias,
                     T=num_style_tokens, C=cross_attention_dim)
    assert out.shape == (B, num_style_tokens, cross_attention_dim)
    assert jnp.allclose(out, ref, atol=2e-2, rtol=2e-2)

    # --- run 2: non-multiple-of-8 batch (padding path) + bf16 write-back knob ---
    feats6 = features[:6]
    out2 = mlp_image_projector(
        feats6, w1, b1, w2, b2, ln_weight, ln_bias,
        num_style_tokens=num_style_tokens,
        cross_attention_dim=cross_attention_dim,
        out_dtype=jnp.bfloat16)
    out2 = jax.block_until_ready(out2)
    ref2 = _reference(feats6, w1, b1, w2, b2, ln_weight, ln_bias,
                      T=num_style_tokens, C=cross_attention_dim)
    assert out2.shape == (6, num_style_tokens, cross_attention_dim)
    assert out2.dtype == jnp.bfloat16
    assert jnp.allclose(out2.astype(jnp.float32), ref2, atol=3e-2, rtol=3e-2)

    print("KERNEL_OK")
</pallas_src>

<mosaic_0001>
module attributes {stable_mosaic.version = 11 : i64} {
  func.func @_mlp_projector_kernel(%arg0: i32, %arg1: i32, %arg2: memref<8x32xbf16, #tpu.memory_space<vmem>>, %arg3: memref<32x32xbf16, #tpu.memory_space<vmem>>, %arg4: memref<1x32xf32, #tpu.memory_space<vmem>>, %arg5: memref<32x256xbf16, #tpu.memory_space<vmem>>, %arg6: memref<1x256xf32, #tpu.memory_space<vmem>>, %arg7: memref<1x256xf32, #tpu.memory_space<vmem>>, %arg8: memref<1x256xf32, #tpu.memory_space<vmem>>, %arg9: memref<8x256xf32, #tpu.memory_space<vmem>>, %arg10: memref<8x32xbf16, #tpu.memory_space<vmem>>) attributes {dimension_semantics = [#tpu.dimension_semantics<parallel>, #tpu.dimension_semantics<arbitrary>], iteration_bounds = array<i64: 1, 4>, scalar_prefetch = 0 : i64, scratch_operands = 1 : i64, tpu.core_type = #tpu.core_type<tc>, window_params = [{transform_indices = @transform_0, window_bounds = array<i64: 8, 32>}, {pipeline_mode = #tpu.pipeline_mode<synchronous>, transform_indices = @transform_1, window_bounds = array<i64: 32, 32>}, {pipeline_mode = #tpu.pipeline_mode<synchronous>, transform_indices = @transform_2, window_bounds = array<i64: 1, 32>}, {transform_indices = @transform_3, window_bounds = array<i64: 32, 256>}, {transform_indices = @transform_4, window_bounds = array<i64: 1, 256>}, {pipeline_mode = #tpu.pipeline_mode<synchronous>, transform_indices = @transform_5, window_bounds = array<i64: 1, 256>}, {pipeline_mode = #tpu.pipeline_mode<synchronous>, transform_indices = @transform_6, window_bounds = array<i64: 1, 256>}, {transform_indices = @transform_7, window_bounds = array<i64: 8, 256>}]} {
    %c0_i32 = arith.constant 0 : i32
    %0 = arith.cmpi eq, %arg1, %c0_i32 : i32
    %1 = arith.extui %0 : i1 to i32
    %c0_i32_0 = arith.constant 0 : i32
    %2 = arith.cmpi ne, %1, %c0_i32_0 : i32
    scf.if %2 {
      %c0_17 = arith.constant 0 : index
      %c0_18 = arith.constant 0 : index
      %36 = vector.load %arg2[%c0_17, %c0_18] : memref<8x32xbf16, #tpu.memory_space<vmem>>, vector<8x32xbf16>
      %c0_19 = arith.constant 0 : index
      %c0_20 = arith.constant 0 : index
      %37 = vector.load %arg3[%c0_19, %c0_20] : memref<32x32xbf16, #tpu.memory_space<vmem>>, vector<32x32xbf16>
      %cst_21 = arith.constant dense<0.000000e+00> : vector<8x32xf32>
      %38 = tpu.matmul %36, %37, %cst_21 {dimension_numbers = #tpu.dot_dimension_numbers<[1], [0], [0], [1], [0, 0, 1, 1], [], []>} : vector<8x32xbf16>, vector<32x32xbf16>, vector<8x32xf32> -> vector<8x32xf32>
      %c0_22 = arith.constant 0 : index
      %c0_23 = arith.constant 0 : index
      %39 = vector.load %arg4[%c0_22, %c0_23] : memref<1x32xf32, #tpu.memory_space<vmem>>, vector<1x32xf32>
      %40 = vector.broadcast %39 : vector<1x32xf32> to vector<8x32xf32>
      %41 = arith.addf %38, %40 : vector<8x32xf32>
      %cst_24 = arith.constant 5.000000e-01 : f32
      %42 = vector.broadcast %cst_24 : f32 to vector<8x32xf32>
      %43 = arith.mulf %42, %41 : vector<8x32xf32>
      %cst_25 = arith.constant 0.707106769 : f32
      %44 = vector.broadcast %cst_25 : f32 to vector<8x32xf32>
      %45 = arith.mulf %41, %44 : vector<8x32xf32>
      %cst_26 = arith.constant 0.000000e+00 : f32
      %46 = vector.broadcast %cst_26 : f32 to vector<8x32xf32>
      %47 = arith.cmpf oge, %45, %46 : vector<8x32xf32>
      %cst_27 = arith.constant 1.000000e+00 : f32
      %cst_28 = arith.constant -1.000000e+00 : f32
      %48 = vector.broadcast %cst_27 : f32 to vector<8x32xf32>
      %49 = vector.broadcast %cst_28 : f32 to vector<8x32xf32>
      %50 = arith.select %47, %48, %49 : vector<8x32xi1>, vector<8x32xf32>
      %51 = math.absf %45 : vector<8x32xf32>
      %cst_29 = arith.constant 0.327591091 : f32
      %52 = vector.broadcast %cst_29 : f32 to vector<8x32xf32>
      %53 = arith.mulf %52, %51 : vector<8x32xf32>
      %cst_30 = arith.constant 1.000000e+00 : f32
      %54 = vector.broadcast %cst_30 : f32 to vector<8x32xf32>
      %55 = arith.addf %54, %53 : vector<8x32xf32>
      %56 = tpu.reciprocal %55 {approx = true} : vector<8x32xf32> -> vector<8x32xf32>
      %cst_31 = arith.constant 1.06140542 : f32
      %57 = vector.broadcast %cst_31 : f32 to vector<8x32xf32>
      %58 = arith.mulf %57, %56 : vector<8x32xf32>
      %cst_32 = arith.constant -1.45315206 : f32
      %59 = vector.broadcast %cst_32 : f32 to vector<8x32xf32>
      %60 = arith.addf %58, %59 : vector<8x32xf32>
      %61 = arith.mulf %60, %56 : vector<8x32xf32>
      %cst_33 = arith.constant 1.42141378 : f32
      %62 = vector.broadcast %cst_33 : f32 to vector<8x32xf32>
      %63 = arith.addf %61, %62 : vector<8x32xf32>
      %64 = arith.mulf %63, %56 : vector<8x32xf32>
      %cst_34 = arith.constant -0.284496725 : f32
      %65 = vector.broadcast %cst_34 : f32 to vector<8x32xf32>
      %66 = arith.addf %64, %65 : vector<8x32xf32>
      %67 = arith.mulf %66, %56 : vector<8x32xf32>
      %cst_35 = arith.constant 0.254829586 : f32
      %68 = vector.broadcast %cst_35 : f32 to vector<8x32xf32>
      %69 = arith.addf %67, %68 : vector<8x32xf32>
      %70 = arith.mulf %69, %56 : vector<8x32xf32>
      %cst_36 = arith.constant 0.000000e+00 : f32
      %71 = vector.broadcast %cst_36 : f32 to vector<8x32xf32>
      %72 = arith.subf %71, %51 : vector<8x32xf32>
      %73 = arith.mulf %72, %51 : vector<8x32xf32>
      %74 = math.exp %73 : vector<8x32xf32>
      %75 = arith.mulf %70, %74 : vector<8x32xf32>
      %cst_37 = arith.constant 1.000000e+00 : f32
      %76 = vector.broadcast %cst_37 : f32 to vector<8x32xf32>
      %77 = arith.subf %76, %75 : vector<8x32xf32>
      %78 = arith.mulf %50, %77 : vector<8x32xf32>
      %cst_38 = arith.constant 1.000000e+00 : f32
      %79 = vector.broadcast %cst_38 : f32 to vector<8x32xf32>
      %80 = arith.addf %79, %78 : vector<8x32xf32>
      %81 = arith.mulf %43, %80 : vector<8x32xf32>
      %82 = arith.truncf %81 : vector<8x32xf32> to vector<8x32xbf16>
      %c0_39 = arith.constant 0 : index
      %c0_40 = arith.constant 0 : index
      %83 = vector.load %arg10[%c0_39, %c0_40] : memref<8x32xbf16, #tpu.memory_space<vmem>>, vector<8x32xbf16>
      tpu.vector_store %arg10[%c0_39, %c0_40], %82 {strides = array<i32>} : memref<8x32xbf16, #tpu.memory_space<vmem>>, vector<8x32xbf16>,
    } else {
    }
    %c0 = arith.constant 0 : index
    %c0_1 = arith.constant 0 : index
    %3 = vector.load %arg10[%c0, %c0_1] : memref<8x32xbf16, #tpu.memory_space<vmem>>, vector<8x32xbf16>
    %c0_2 = arith.constant 0 : index
    %c0_3 = arith.constant 0 : index
    %4 = vector.load %arg5[%c0_2, %c0_3] : memref<32x256xbf16, #tpu.memory_space<vmem>>, vector<32x256xbf16>
    %cst = arith.constant dense<0.000000e+00> : vector<8x256xf32>
    %5 = tpu.matmul %3, %4, %cst {dimension_numbers = #tpu.dot_dimension_numbers<[1], [0], [0], [1], [0, 0, 1, 1], [], []>} : vector<8x32xbf16>, vector<32x256xbf16>, vector<8x256xf32> -> vector<8x256xf32>
    %c0_4 = arith.constant 0 : index
    %c0_5 = arith.constant 0 : index
    %6 = vector.load %arg6[%c0_4, %c0_5] : memref<1x256xf32, #tpu.memory_space<vmem>>, vector<1x256xf32>
    %7 = vector.broadcast %6 : vector<1x256xf32> to vector<8x256xf32>
    %8 = arith.addf %5, %7 : vector<8x256xf32>
    %cst_6 = arith.constant dense<0.000000e+00> : vector<8xf32>
    %9 = vector.multi_reduction <add>, %8, %cst_6 [1] : vector<8x256xf32> to vector<8xf32>
    %10 = vector.shape_cast %9 : vector<8xf32> to vector<8x1xf32>
    %cst_7 = arith.constant 2.560000e+02 : f32
    %11 = vector.broadcast %cst_7 : f32 to vector<8x1xf32>
    %12 = arith.divf %10, %11 : vector<8x1xf32>
    %13 = vector.broadcast %12 : vector<8x1xf32> to vector<8x256xf32>
    %14 = arith.subf %8, %13 : vector<8x256xf32>
    %15 = vector.broadcast %12 : vector<8x1xf32> to vector<8x256xf32>
    %16 = arith.subf %8, %15 : vector<8x256xf32>
    %17 = arith.mulf %14, %16 : vector<8x256xf32>
    %cst_8 = arith.constant dense<0.000000e+00> : vector<8xf32>
    %18 = vector.multi_reduction <add>, %17, %cst_8 [1] : vector<8x256xf32> to vector<8xf32>
    %19 = vector.shape_cast %18 : vector<8xf32> to vector<8x1xf32>
    %cst_9 = arith.constant 2.560000e+02 : f32
    %20 = vector.broadcast %cst_9 : f32 to vector<8x1xf32>
    %21 = arith.divf %19, %20 : vector<8x1xf32>
    %22 = vector.broadcast %12 : vector<8x1xf32> to vector<8x256xf32>
    %23 = arith.subf %8, %22 : vector<8x256xf32>
    %cst_10 = arith.constant 9.99999974E-6 : f32
    %24 = vector.broadcast %cst_10 : f32 to vector<8x1xf32>
    %25 = arith.addf %21, %24 : vector<8x1xf32>
    %26 = math.rsqrt %25 : vector<8x1xf32>
    %27 = vector.broadcast %26 : vector<8x1xf32> to vector<8x256xf32>
    %28 = arith.mulf %23, %27 : vector<8x256xf32>
    %c0_11 = arith.constant 0 : index
    %c0_12 = arith.constant 0 : index
    %29 = vector.load %arg7[%c0_11, %c0_12] : memref<1x256xf32, #tpu.memory_space<vmem>>, vector<1x256xf32>
    %30 = vector.broadcast %29 : vector<1x256xf32> to vector<8x256xf32>
    %31 = arith.mulf %28, %30 : vector<8x256xf32>
    %c0_13 = arith.constant 0 : index
    %c0_14 = arith.constant 0 : index
    %32 = vector.load %arg8[%c0_13, %c0_14] : memref<1x256xf32, #tpu.memory_space<vmem>>, vector<1x256xf32>
    %33 = vector.broadcast %32 : vector<1x256xf32> to vector<8x256xf32>
    %34 = arith.addf %31, %33 : vector<8x256xf32>
    %c0_15 = arith.constant 0 : index
    %c0_16 = arith.constant 0 : index
    %35 = vector.load %arg9[%c0_15, %c0_16] : memref<8x256xf32, #tpu.memory_space<vmem>>, vector<8x256xf32>
    tpu.vector_store %arg9[%c0_15, %c0_16], %34 {strides = array<i32>} : memref<8x256xf32, #tpu.memory_space<vmem>>, vector<8x256xf32>,
    return
  }
  func.func @transform_0(%arg0: i32, %arg1: i32) -> (i32, i32) {
    %c0_i32 = arith.constant 0 : i32
    %c0_i32_0 = arith.constant 0 : i32
    return %arg0, %c0_i32 : i32, i32
  }
  func.func @transform_1(%arg0: i32, %arg1: i32) -> (i32, i32) {
    %c0_i32 = arith.constant 0 : i32
    %c0_i32_0 = arith.constant 0 : i32
    %c0_i32_1 = arith.constant 0 : i32
    return %c0_i32, %c0_i32_0 : i32, i32
  }
  func.func @transform_2(%arg0: i32, %arg1: i32) -> (i32, i32) {
    %c0_i32 = arith.constant 0 : i32
    %c0_i32_0 = arith.constant 0 : i32
    %c0_i32_1 = arith.constant 0 : i32
    return %c0_i32, %c0_i32_0 : i32, i32
  }
  func.func @transform_3(%arg0: i32, %arg1: i32) -> (i32, i32) {
    %c0_i32 = arith.constant 0 : i32
    %c0_i32_0 = arith.constant 0 : i32
    return %c0_i32, %arg1 : i32, i32
  }
  func.func @transform_4(%arg0: i32, %arg1: i32) -> (i32, i32) {
    %c0_i32 = arith.constant 0 : i32
    %c0_i32_0 = arith.constant 0 : i32
    return %c0_i32, %arg1 : i32, i32
  }
  func.func @transform_5(%arg0: i32, %arg1: i32) -> (i32, i32) {
    %c0_i32 = arith.constant 0 : i32
    %c0_i32_0 = arith.constant 0 : i32
    %c0_i32_1 = arith.constant 0 : i32
    return %c0_i32, %c0_i32_0 : i32, i32
  }
  func.func @transform_6(%arg0: i32, %arg1: i32) -> (i32, i32) {
    %c0_i32 = arith.constant 0 : i32
    %c0_i32_0 = arith.constant 0 : i32
    %c0_i32_1 = arith.constant 0 : i32
    return %c0_i32, %c0_i32_0 : i32, i32
  }
  func.func @transform_7(%arg0: i32, %arg1: i32) -> (i32, i32) {
    %c0_i32 = arith.constant 0 : i32
    return %arg0, %arg1 : i32, i32
  }
}

</mosaic_0001>

<llo_original>
// kernel: tpu_custom_call.1
$region0: #{tpu_custom_call.1}
  #allocation0 [shape = 'u32[]', space=smem, size = 0x4, offset = 0x4, fixed_abs, tag = 'smem constant byte address 0x4 - core index']
  #allocation1 [shape = 'u32[144,128]{1,0:T(1,128)}', space=vmem, size = 0x12000, scoped, tag = 'internal scratch']
  #allocation2 [shape = 'bf16[8,32]{1,0:T(8,128)(2,1)}', space=vmem, size = 0x800, scoped, tag = 'scratch operand']
  %s0 = inlined_call_operand.hbm [shape: bf16[8,32], index: 0, kind: input, shape index: {}]
  %s1 = inlined_call_operand.hbm [shape: bf16[32,32], index: 1, kind: input, shape index: {}]
  %s2 = inlined_call_operand.vmem [shape: f32[1,32], index: 2, kind: input, shape index: {}]
  %s3 = inlined_call_operand.hbm [shape: bf16[32,1024], index: 3, kind: input, shape index: {}]
  %s4 = inlined_call_operand.hbm [shape: f32[1,1024], index: 4, kind: input, shape index: {}]
  %s5 = inlined_call_operand.vmem [shape: f32[1,256], index: 5, kind: input, shape index: {}]
  %s6 = inlined_call_operand.vmem [shape: f32[1,256], index: 6, kind: input, shape index: {}]
  %s7 = inlined_call_operand.hbm [shape: f32[8,1024], index: 7, kind: output, shape index: {}]
  %s8 = sld [smem:[#allocation0]]
  $region81: #{tpu_custom_call.1} parent=0
    _
  %s10 = ssub.s32 1, %s8
  %s11 = scalar_select 0, %s10, %s8
  $region1: #{tpu_custom_call.1} parent=0
    #allocation3 [shape = 'u8[2048]{0}', space=vmem, size = 0x800, scoped, tag = 'input window, operand 0, single buffered']
    #allocation4 [shape = 's32[2]{0}', space=sflag, size = 0x8, scoped, tag = 'scoped memory for tpu_custom_call.1']
    #allocation5 [shape = 's32[2]{0}', space=sflag, size = 0x8, scoped, tag = 'scoped memory for tpu_custom_call.1']
    #allocation6 [shape = 'u8[8192]{0}', space=vmem, size = 0x2000, scoped, tag = 'input window, operand 1, single buffered']
    #allocation7 [shape = 's32[1]{0}', space=sflag, size = 0x4, scoped, tag = 'scoped memory for tpu_custom_call.1']
    #allocation8 [shape = 'u8[32768]{0}', space=vmem, size = 0x8000, scoped, tag = 'input window, operand 3']
    #allocation9 [shape = 'u8[2048]{0}', space=vmem, size = 0x800, scoped, tag = 'input window, operand 4']
    #allocation10 [shape = 'u8[16384]{0}', space=vmem, size = 0x4000, scoped, tag = 'output window, operand 0']
    %12 = vsyncpa [#allocation4], 0
    %13 = vsyncpa [#allocation7], 0
    %14 = vsyncpa [#allocation5], 0
    %s15 = scalar_lea.sflag [#allocation5], 1
    %16 = vsyncpa %s15, 0
    loop: start=0, step=1, limit=6
    $region2: #{tpu_custom_call.1} parent=1 // loop_pre_header
      _
    $region3: #{tpu_custom_call.1} parent=1 // loop_header
      %s18 = sphi 0, %s22
      %p19 = scmp.ge.s32.totalorder %s18, 6
      %s25 = sphi 0, %s37
      %s26 = sphi 0, %s33
      %s27 = sphi 0, %s25
      %s28 = sphi 0, %s26
      %s29 = sphi 0, %s27
      %s30 = sphi 0, %s28
      %s40 = sphi 0, %s42
      %s43 = sphi 0, %s40
      %s44 = sphi 0, %s43
      %s60 = sphi 0, %s44
      %s64 = sphi 0, %s64
      %s66 = sphi 0, %s64
      %s67 = sphi 0, %s66
      %s81 = sphi 0, %s67
      %s85 = sphi 0, %s85
      %s87 = sphi 0, %s85
      %s88 = sphi 0, %s87
      %s102 = sphi 0, %s88
      %s108 = sphi 0, %s110
      %s111 = sphi 0, %s108
      %s112 = sphi 0, %s111
      %s128 = sphi 0, %s112
      %s134 = sphi 0, %s136
      %s137 = sphi 0, %s134
      %s138 = sphi 0, %s137
      %s154 = sphi 0, %s138
      %s158 = sphi 0, %s158
      %s160 = sphi 0, %s158
      %s161 = sphi 0, %s160
      %s175 = sphi 0, %s161
      %s179 = sphi 0, %s179
      %s181 = sphi 0, %s179
      %s182 = sphi 0, %s181
      %s196 = sphi 0, %s182
      %s204 = sphi 0, %s206
      %s207 = sphi 0, %s204
      %s208 = sphi 0, %s207
      %s224 = sphi 0, %s208
    $region4: #{tpu_custom_call.1} parent=1 // loop_header_branch
      %21 = sbr.rel (%p19) target = $region8
    $region5: #{tpu_custom_call.1} parent=1 // loop_body
      %s23 = ssub.s32 %s18, 1
      %s24 = ssub.s32 %s18, 2
      %s31 = sadd.s32 1, %s26
      %p32 = scmp.ge.s32.totalorder %s31, 4
      %s33 = scalar_select %p32, 0, %s31
      %s34 = sadd.s32 1, %s25
      %s35 = scalar_select %p32, %s34, %s25
      %p36 = scmp.ge.s32.totalorder %s35, 1
      %s37 = scalar_select %p36, 0, %s35
      %s38 = ssub.s32 %s25, %s37
      %p39 = scmp.eq.s32.totalorder %s38, 0
      %s41 = sadd.s32 %s40, 1
      %s42 = scalar_select %p39, %s40, %s41
      %p45 = pneg %p39
      %p46 = scmp.eq.s32.totalorder %s18, 3
      %p47 = por %p45, %p46
      %p48 = scmp.ne.s32.totalorder %s40, %s43
      %p49 = scmp.eq.s32.totalorder %s18, 0
      %p50 = por %p48, %p49
      %p51 = scmp.ne.s32.totalorder %s40, %s43
      %p52 = scmp.eq.s32.totalorder %s23, 3
      %p53 = por %p51, %p52
      %p54 = scmp.ne.s32.totalorder %s43, %s44
      %p55 = scmp.eq.s32.totalorder %s23, 0
      %p56 = por %p54, %p55
      %p57 = scmp.ne.s32.totalorder %s43, %s44
      %p58 = scmp.eq.s32.totalorder %s24, 3
      %p59 = por %p57, %p58
      %p61 = scmp.ne.s32.totalorder %s44, %s60
      %p62 = scmp.eq.s32.totalorder %s24, 0
      %p63 = por %p61, %p62
      %s65 = sadd.s32 %s64, 1
      %p68 = scmp.eq.s32.totalorder %s18, 3
      %p69 = scmp.ne.s32.totalorder %s64, %s66
      %p70 = scmp.eq.s32.totalorder %s18, 0
      %p71 = por %p69, %p70
      %p72 = scmp.ne.s32.totalorder %s64, %s66
      %p73 = scmp.eq.s32.totalorder %s23, 3
      %p74 = por %p72, %p73
      %p75 = scmp.ne.s32.totalorder %s66, %s67
      %p76 = scmp.eq.s32.totalorder %s23, 0
      %p77 = por %p75, %p76
      %p78 = scmp.ne.s32.totalorder %s66, %s67
      %p79 = scmp.eq.s32.totalorder %s24, 3
      %p80 = por %p78, %p79
      %p82 = scmp.ne.s32.totalorder %s67, %s81
      %p83 = scmp.eq.s32.totalorder %s24, 0
      %p84 = por %p82, %p83
      %s86 = sadd.s32 %s85, 1
      %p89 = scmp.eq.s32.totalorder %s18, 3
      %p90 = scmp.ne.s32.totalorder %s85, %s87
      %p91 = scmp.eq.s32.totalorder %s18, 0
      %p92 = por %p90, %p91
      %p93 = scmp.ne.s32.totalorder %s85, %s87
      %p94 = scmp.eq.s32.totalorder %s23, 3
      %p95 = por %p93, %p94
      %p96 = scmp.ne.s32.totalorder %s87, %s88
      %p97 = scmp.eq.s32.totalorder %s23, 0
      %p98 = por %p96, %p97
      %p99 = scmp.ne.s32.totalorder %s87, %s88
      %p100 = scmp.eq.s32.totalorder %s24, 3
      %p101 = por %p99, %p100
      %p103 = scmp.ne.s32.totalorder %s88, %s102
      %p104 = scmp.eq.s32.totalorder %s24, 0
      %p105 = por %p103, %p104
      %s106 = ssub.s32 %s26, %s33
      %p107 = scmp.eq.s32.totalorder %s106, 0
      %s109 = sadd.s32 %s108, 1
      %s110 = scalar_select %p107, %s108, %s109
      %p113 = pneg %p107
      %p114 = scmp.eq.s32.totalorder %s18, 3
      %p115 = por %p113, %p114
      %p116 = scmp.ne.s32.totalorder %s108, %s111
      %p117 = scmp.eq.s32.totalorder %s18, 0
      %p118 = por %p116, %p117
      %p119 = scmp.ne.s32.totalorder %s108, %s111
      %p120 = scmp.eq.s32.totalorder %s23, 3
      %p121 = por %p119, %p120
      %p122 = scmp.ne.s32.totalorder %s111, %s112
      %p123 = scmp.eq.s32.totalorder %s23, 0
      %p124 = por %p122, %p123
      %p125 = scmp.ne.s32.totalorder %s111, %s112
      %p126 = scmp.eq.s32.totalorder %s24, 3
      %p127 = por %p125, %p126
      %p129 = scmp.ne.s32.totalorder %s112, %s128
      %p130 = scmp.eq.s32.totalorder %s24, 0
      %p131 = por %p129, %p130
      %s132 = ssub.s32 %s26, %s33
      %p133 = scmp.eq.s32.totalorder %s132, 0
      %s135 = sadd.s32 %s134, 1
      %s136 = scalar_select %p133, %s134, %s135
      %p139 = pneg %p133
      %p140 = scmp.eq.s32.totalorder %s18, 3
      %p141 = por %p139, %p140
      %p142 = scmp.ne.s32.totalorder %s134, %s137
      %p143 = scmp.eq.s32.totalorder %s18, 0
      %p144 = por %p142, %p143
      %p145 = scmp.ne.s32.totalorder %s134, %s137
      %p146 = scmp.eq.s32.totalorder %s23, 3
      %p147 = por %p145, %p146
      %p148 = scmp.ne.s32.totalorder %s137, %s138
      %p149 = scmp.eq.s32.totalorder %s23, 0
      %p150 = por %p148, %p149
      %p151 = scmp.ne.s32.totalorder %s137, %s138
      %p152 = scmp.eq.s32.totalorder %s24, 3
      %p153 = por %p151, %p152
      %p155 = scmp.ne.s32.totalorder %s138, %s154
      %p156 = scmp.eq.s32.totalorder %s24, 0
      %p157 = por %p155, %p156
      %s159 = sadd.s32 %s158, 1
      %p162 = scmp.eq.s32.totalorder %s18, 3
      %p163 = scmp.ne.s32.totalorder %s158, %s160
      %p164 = scmp.eq.s32.totalorder %s18, 0
      %p165 = por %p163, %p164
      %p166 = scmp.ne.s32.totalorder %s158, %s160
      %p167 = scmp.eq.s32.totalorder %s23, 3
      %p168 = por %p166, %p167
      %p169 = scmp.ne.s32.totalorder %s160, %s161
      %p170 = scmp.eq.s32.totalorder %s23, 0
      %p171 = por %p169, %p170
      %p172 = scmp.ne.s32.totalorder %s160, %s161
      %p173 = scmp.eq.s32.totalorder %s24, 3
      %p174 = por %p172, %p173
      %p176 = scmp.ne.s32.totalorder %s161, %s175
      %p177 = scmp.eq.s32.totalorder %s24, 0
      %p178 = por %p176, %p177
      %s180 = sadd.s32 %s179, 1
      %p183 = scmp.eq.s32.totalorder %s18, 3
      %p184 = scmp.ne.s32.totalorder %s179, %s181
      %p185 = scmp.eq.s32.totalorder %s18, 0
      %p186 = por %p184, %p185
      %p187 = scmp.ne.s32.totalorder %s179, %s181
      %p188 = scmp.eq.s32.totalorder %s23, 3
      %p189 = por %p187, %p188
      %p190 = scmp.ne.s32.totalorder %s181, %s182
      %p191 = scmp.eq.s32.totalorder %s23, 0
      %p192 = por %p190, %p191
      %p193 = scmp.ne.s32.totalorder %s181, %s182
      %p194 = scmp.eq.s32.totalorder %s24, 3
      %p195 = por %p193, %p194
      %p197 = scmp.ne.s32.totalorder %s182, %s196
      %p198 = scmp.eq.s32.totalorder %s24, 0
      %p199 = por %p197, %p198
      %s200 = ssub.s32 %s25, %s37
      %s201 = ssub.s32 %s26, %s33
      %s202 = sor.u32 %s200, %s201
      %p203 = scmp.eq.s32.totalorder %s202, 0
      %s205 = sadd.s32 %s204, 1
      %s206 = scalar_select %p203, %s204, %s205
      %p209 = pneg %p203
      %p210 = scmp.eq.s32.totalorder %s18, 3
      %p211 = por %p209, %p210
      %p212 = scmp.ne.s32.totalorder %s204, %s207
      %p213 = scmp.eq.s32.totalorder %s18, 0
      %p214 = por %p212, %p213
      %p215 = scmp.ne.s32.totalorder %s204, %s207
      %p216 = scmp.eq.s32.totalorder %s23, 3
      %p217 = por %p215, %p216
      %p218 = scmp.ne.s32.totalorder %s207, %s208
      %p219 = scmp.eq.s32.totalorder %s23, 0
      %p220 = por %p218, %p219
      %p221 = scmp.ne.s32.totalorder %s207, %s208
      %p222 = scmp.eq.s32.totalorder %s24, 3
      %p223 = por %p221, %p222
      %p225 = scmp.ne.s32.totalorder %s208, %s224
      %p226 = scmp.eq.s32.totalorder %s24, 0
      %p227 = por %p225, %p226
      %p228 = scmp.le.s32.totalorder 1, %s18
      %p229 = scmp.lt.s32.totalorder %s18, 5
      %p230 = pnand %p228, %p229
      %p231 = pneg %p230
      // Predicated region
      $region9: #{tpu_custom_call.1} parent=5 // pred_check
        _
      $region10: #{tpu_custom_call.1} parent=5 // pred_check_branch
        %233 = sbr.rel (%p230) target = $region12
      $region11: #{tpu_custom_call.1} parent=5 // pred_region
        %s234 = ssub.s32 %s18, 1
        // Predicated region
        $region13: #{tpu_custom_call.1} parent=11 // pred_check
          %p235 = pneg %p56
        $region14: #{tpu_custom_call.1} parent=11 // pred_check_branch
          %237 = sbr.rel (%p235) target = $region16
        $region15: #{tpu_custom_call.1} parent=11 // pred_region
          %s239 = ssub.s32 64, 64
          %240 = vsyncadd [#allocation4], %s239
          %s241 = smul.addr %s27, 64
          %s242 = scalar_lea.hbm %s0, %s241
          %s244 = sshll.u32 [#allocation3], 4
          %s245 = int_to_ptr.vmem [resolvable:$true] %s244
          %247 = dma.hbm_to_vmem [thread:$0]  %s242, 64, %s245, [#allocation4]
        $region16: #{tpu_custom_call.1} parent=11 // pred_fallthru
          _
        // Predicated region
        $region17: #{tpu_custom_call.1} parent=11 // pred_check
          %p248 = pneg %p77
        $region18: #{tpu_custom_call.1} parent=11 // pred_check_branch
          %250 = sbr.rel (%p248) target = $region20
        $region19: #{tpu_custom_call.1} parent=11 // pred_region
          %s252 = ssub.s32 256, 256
          %253 = vsyncadd [#allocation7], %s252
          %s254 = sshll.u32 [#allocation6], 4
          %s255 = int_to_ptr.vmem [resolvable:$true] %s254
          %260 = dma.hbm_to_vmem [thread:$0]  %s1, 256, %s255, [#allocation7], 64, 64, 4
        $region20: #{tpu_custom_call.1} parent=11 // pred_fallthru
          _
        // Predicated region
        $region21: #{tpu_custom_call.1} parent=11 // pred_check
          %p261 = pneg %p98
        $region22: #{tpu_custom_call.1} parent=11 // pred_check_branch
          %263 = sbr.rel (%p261) target = $region24
        $region23: #{tpu_custom_call.1} parent=11 // pred_region
          _
        $region24: #{tpu_custom_call.1} parent=11 // pred_fallthru
          _
        // Predicated region
        $region25: #{tpu_custom_call.1} parent=11 // pred_check
          %p264 = pneg %p171
        $region26: #{tpu_custom_call.1} parent=11 // pred_check_branch
          %266 = sbr.rel (%p264) target = $region28
        $region27: #{tpu_custom_call.1} parent=11 // pred_region
          _
        $region28: #{tpu_custom_call.1} parent=11 // pred_fallthru
          _
        // Predicated region
        $region29: #{tpu_custom_call.1} parent=11 // pred_check
          %p267 = pneg %p192
        $region30: #{tpu_custom_call.1} parent=11 // pred_check_branch
          %269 = sbr.rel (%p267) target = $region32
        $region31: #{tpu_custom_call.1} parent=11 // pred_region
          _
        $region32: #{tpu_custom_call.1} parent=11 // pred_fallthru
          _
      $region12: #{tpu_custom_call.1} parent=5 // pred_fallthru
        _
      %p270 = scmp.lt.s32.totalorder %s18, 4
      // Predicated region
      $region33: #{tpu_custom_call.1} parent=5 // pred_check
        %p271 = pneg %p270
      $region34: #{tpu_custom_call.1} parent=5 // pred_check_branch
        %273 = sbr.rel (%p271) target = $region36
      $region35: #{tpu_custom_call.1} parent=5 // pred_region
        // Predicated region
        $region37: #{tpu_custom_call.1} parent=35 // pred_check
          %p274 = pneg %p118
        $region38: #{tpu_custom_call.1} parent=35 // pred_check_branch
          %276 = sbr.rel (%p274) target = $region40
        $region39: #{tpu_custom_call.1} parent=35 // pred_region
          %s277 = sand.u32 %s18, 1
          %s278 = scalar_lea.sflag [#allocation4], %s277
          %s279 = sand.u32 %s108, 1
          %s280 = smul.addr %s279, 32
          %s281 = scalar_lea.vmem [#allocation8], %s280
          %s282 = smul.u32 2, %s26
          %s284 = ssub.s32 512, 512
          %285 = vsyncadd %s278, %s284
          %s286 = smul.addr %s282, 64
          %s287 = scalar_lea.hbm %s3, %s286
          %s288 = sshll.u32 %s281, 4
          %s289 = int_to_ptr.vmem [resolvable:$true] %s288
          %294 = dma.hbm_to_vmem [thread:$0]  %s287, 512, %s289, %s278, 512, 128, 8
        $region40: #{tpu_custom_call.1} parent=35 // pred_fallthru
          _
        // Predicated region
        $region41: #{tpu_custom_call.1} parent=35 // pred_check
          %p295 = pneg %p144
        $region42: #{tpu_custom_call.1} parent=35 // pred_check_branch
          %297 = sbr.rel (%p295) target = $region44
        $region43: #{tpu_custom_call.1} parent=35 // pred_region
          %s298 = sand.u32 %s18, 1
          %s299 = scalar_lea.sflag [#allocation4], %s298
          %s300 = sand.u32 %s134, 1
          %s301 = smul.addr %s300, 2
          %s302 = scalar_lea.vmem [#allocation9], %s301
          %s303 = smul.u32 2, %s26
          %s305 = ssub.s32 32, 32
          %306 = vsyncadd %s299, %s305
          %s307 = smul.addr %s303, 16
          %s308 = scalar_lea.hbm %s4, %s307
          %s310 = sshll.u32 %s302, 4
          %s311 = int_to_ptr.vmem [resolvable:$true] %s310
          %313 = dma.hbm_to_vmem [thread:$0]  %s308, 32, %s311, %s299
        $region44: #{tpu_custom_call.1} parent=35 // pred_fallthru
          _
      $region36: #{tpu_custom_call.1} parent=5 // pred_fallthru
        _
      %p314 = scmp.le.s32.totalorder 1, %s18
      %p315 = scmp.lt.s32.totalorder %s18, 5
      %p316 = pnand %p314, %p315
      %p317 = pneg %p316
      // Predicated region
      $region45: #{tpu_custom_call.1} parent=5 // pred_check
        _
      $region46: #{tpu_custom_call.1} parent=5 // pred_check_branch
        %319 = sbr.rel (%p316) target = $region48
      $region47: #{tpu_custom_call.1} parent=5 // pred_region
        %s320 = ssub.s32 %s18, 1
        // Predicated region
        $region49: #{tpu_custom_call.1} parent=47 // pred_check
          %p321 = pneg %p56
        $region50: #{tpu_custom_call.1} parent=47 // pred_check_branch
          %323 = sbr.rel (%p321) target = $region52
        $region51: #{tpu_custom_call.1} parent=47 // pred_region
          %324 = dma.done [#allocation4], 64
        $region52: #{tpu_custom_call.1} parent=47 // pred_fallthru
          _
        // Predicated region
        $region53: #{tpu_custom_call.1} parent=47 // pred_check
          %p325 = pneg %p77
        $region54: #{tpu_custom_call.1} parent=47 // pred_check_branch
          %327 = sbr.rel (%p325) target = $region56
        $region55: #{tpu_custom_call.1} parent=47 // pred_region
          %328 = dma.done [#allocation7], 256
        $region56: #{tpu_custom_call.1} parent=47 // pred_fallthru
          _
        %s329 = sand.u32 %s23, 1
        %s330 = scalar_lea.sflag [#allocation4], %s329
        %s331 = sand.u32 %s111, 1
        %s332 = smul.addr %s331, 32
        %s333 = scalar_lea.vmem [#allocation8], %s332
        // Predicated region
        $region57: #{tpu_custom_call.1} parent=47 // pred_check
          %p334 = pneg %p124
        $region58: #{tpu_custom_call.1} parent=47 // pred_check_branch
          %336 = sbr.rel (%p334) target = $region60
        $region59: #{tpu_custom_call.1} parent=47 // pred_region
          %337 = dma.done %s330, 512
        $region60: #{tpu_custom_call.1} parent=47 // pred_fallthru
          _
        %s338 = sand.u32 %s23, 1
        %s339 = scalar_lea.sflag [#allocation4], %s338
        %s340 = sand.u32 %s137, 1
        %s341 = smul.addr %s340, 2
        %s342 = scalar_lea.vmem [#allocation9], %s341
        // Predicated region
        $region61: #{tpu_custom_call.1} parent=47 // pred_check
          %p343 = pneg %p150
        $region62: #{tpu_custom_call.1} parent=47 // pred_check_branch
          %345 = sbr.rel (%p343) target = $region64
        $region63: #{tpu_custom_call.1} parent=47 // pred_region
          %346 = dma.done %s339, 32
        $region64: #{tpu_custom_call.1} parent=47 // pred_fallthru
          _
        %p347 = pneg %p56
        %p348 = pneg %p53
        %p349 = pneg %p77
        %p350 = pneg %p74
        %p351 = pneg %p98
        %p352 = pneg %p95
        %s353 = sand.u32 %s23, 1
        %s354 = scalar_lea.sflag [#allocation4], %s353
        %s355 = sand.u32 %s111, 1
        %s356 = smul.addr %s355, 32
        %s357 = scalar_lea.vmem [#allocation8], %s356
        %p358 = pneg %p124
        %p359 = pneg %p121
        %s360 = sand.u32 %s23, 1
        %s361 = scalar_lea.sflag [#allocation4], %s360
        %s362 = sand.u32 %s137, 1
        %s363 = smul.addr %s362, 2
        %s364 = scalar_lea.vmem [#allocation9], %s363
        %p365 = pneg %p150
        %p366 = pneg %p147
        %p367 = pneg %p171
        %p368 = pneg %p168
        %p369 = pneg %p192
        %p370 = pneg %p189
        %p371 = pneg %p220
        %p372 = pneg %p217
        %s373 = sand.u32 %s207, 1
        %s374 = scalar_lea.sflag [#allocation5], %s373
        %s375 = sand.u32 %s207, 1
        %s376 = smul.addr %s375, 16
        %s377 = scalar_lea.vmem [#allocation10], %s376
        %s378 = smul.u32 2, %s28
        %s379 = smul.u32 2, %s28
        %s380 = smul.u32 2, %s28
        %p382 = scmp.eq.s32.totalorder %s28, 0
        // Predicated region
        $region65: #{tpu_custom_call.1} parent=47 // pred_check
          %p383 = pneg %p382
        $region66: #{tpu_custom_call.1} parent=47 // pred_check_branch
          %385 = sbr.rel (%p383) target = $region68
        $region67: #{tpu_custom_call.1} parent=47 // pred_region
          %v386 = vld [vmem:[#allocation3] sm:$0xf]
          %v387 = vld [vmem:[#allocation6] sm:$0xf]
          %v388 = vld [vmem:[#allocation6 + $0x4] sm:$0xf]
          %v389 = vld [vmem:[#allocation6 + $0x8] sm:$0xf]
          %v390 = vld [vmem:[#allocation6 + $0xc] sm:$0xf]
          %v391 = vld [vmem:[%s2] sm:$0x1]
          %v393 = vlaneseq
          %v394 = vshrl.u32 %v393, 7
          %v395 = vsub.s32 0, %v394
          %v396 = vrot.slane %v391, %v395
          %v402 = vunpack.c.l.b16 %v387
          %v403 = vunpack.c.l.b16 %v388
          %v404 = vunpack.c.l.b16 %v389
          %v405 = vunpack.c.l.b16 %v390
          %v406 = vpack.c.b16 %v403, %v402
          %v407 = vpack.c.b16 %v405, %v404
          %vm410 = vcmask 261120
          %v412 = vsel %vm410, %v386, 0
          %414 = vmatprep.subr.bf16.mxu0 0
          %415 = vmatpush1.bf16.msra.mxu0 0
          %416 = vmatprep.subr.bf16.mxu0 0
          %417 = vmatpush1.bf16.msra.mxu0 0
          %418 = vmatprep.subr.bf16.mxu0 0
          %419 = vmatpush1.bf16.msra.mxu0 0
          %420 = vmatprep.subr.bf16.mxu0 0
          %421 = vmatpush1.bf16.msra.mxu0 0
          %422 = vmatprep.subr.bf16.mxu0 0
          %423 = vmatpush1.bf16.msra.mxu0 0
          %424 = vmatprep.subr.bf16.mxu0 0
          %425 = vmatpush1.bf16.msra.mxu0 0
          %426 = vmatprep.subr.bf16.mxu0 0
          %427 = vmatpush1.bf16.msra.mxu0 %v407
          %428 = vmatprep.subr.bf16.mxu0 0
          %429 = vmatpush1.bf16.msra.mxu0 %v406
          %430 = vmatprep.subr.bf16.mxu0 0
          %431 = vmatpush2.bf16.msra.mxu0 0
          %432 = vmatprep.subr.bf16.mxu0 0
          %433 = vmatpush2.bf16.msra.mxu0 0
          %434 = vmatprep.subr.bf16.mxu0 0
          %435 = vmatpush2.bf16.msra.mxu0 0
          %436 = vmatprep.subr.bf16.mxu0 0
          %437 = vmatpush2.bf16.msra.mxu0 0
          %438 = vmatprep.subr.bf16.mxu0 0
          %439 = vmatpush2.bf16.msra.mxu0 0
          %440 = vmatprep.subr.bf16.mxu0 0
          %441 = vmatpush2.bf16.msra.mxu0 0
          %442 = vmatprep.subr.bf16.mxu0 0
          %443 = vmatpush2.bf16.msra.mxu0 0
          %444 = vmatprep.subr.bf16.mxu0 0
          %445 = vmatpush2.bf16.msra.mxu0 0
          %446 = vmatprep.mubr.bf16.mxu0 0
          %447 = vmatmul.mubr.bf16.gmra.mxu0 %v412
          %v448 = vpop.f32.mrf.mxu0
          %v449 = vadd.f32 %v396, %v448
          %v450 = vpop.f32.mrf.mxu0
          %v451 = vpop.f32.mrf.mxu0
          %v452 = vpop.f32.mrf.mxu0
          %453 = vdwg.mxu0
          %v454 = vmul.f32 %v449, 0.5
          %v455 = vmul.f32 %v449, 0.70710677
          %vm456 = vcmp.ge.f32.partialorder %v455, 0.0
          %v457 = vsel %vm456, 1.0, -1.0
          %v458 = vand.u32 2147483647, %v455
          %v459 = vmul.f32 %v458, 0.3275911
          %v460 = vadd.f32 %v459, 1.0
          %v461 = vrcp.pop %v460
          %v462 = vmul.f32 %v461, 1.0614054
          %v463 = vadd.f32 %v462, -1.4531521
          %v464 = vmul.f32 %v463, %v461
          %v465 = vadd.f32 %v464, 1.4214138
          %v466 = vmul.f32 %v465, %v461
          %v467 = vadd.f32 %v466, -0.28449672
          %v468 = vmul.f32 %v467, %v461
          %v469 = vadd.f32 %v468, 0.2548296
          %v470 = vmul.f32 %v469, %v461
          %v471 = vsub.f32 0.0, %v458
          %v472 = vmul.f32 %v471, %v458
          %v473 = vmul.f32 %v472, 1.442695
          %v474 = vpow.pop %v473
          %v475 = vmul.f32 %v470, %v474
          %v476 = vsub.f32 1.0, %v475
          %v477 = vmul.f32 %v457, %v476
          %v478 = vadd.f32 %v477, 1.0
          %v479 = vmul.f32 %v454, %v478
          %v480 = vpack.c.bf16 %v479, %v479
          %vm481 = vcmask 257024
          %482 = vst.msk [vmem:[#allocation2] sm:$0xf] %vm481, %v480
        $region68: #{tpu_custom_call.1} parent=47 // pred_fallthru
          _
        %v483 = vld [vmem:[#allocation2] sm:$0xf]
        %v484 = vld [vmem:[%s333] sm:$0xff]
        %v485 = vld [vmem:[%s333 + $0x8] sm:$0xff]
        %v486 = vld [vmem:[%s333 + $0x10] sm:$0xff]
        %v487 = vld [vmem:[%s333 + $0x18] sm:$0xff]
        %v488 = vld [vmem:[%s342] sm:$0x3]
        %v490 = vlaneseq
        %v491 = vshrl.u32 %v490, 7
        %v492 = vsub.s32 0, %v491
        %v493 = vrot.slane %v488, %v492
        %v494 = vlaneseq
        %v495 = vshrl.u32 %v494, 7
        %v496 = vsub.s32 1, %v495
        %v497 = vrot.slane %v488, %v496
        %v504 = vunpack.c.l.b16 %v484
        %v505 = vunpack.c.h.b16 %v484
        %v506 = vunpack.c.l.b16 %v485
        %v507 = vunpack.c.h.b16 %v485
        %v508 = vunpack.c.l.b16 %v486
        %v509 = vunpack.c.h.b16 %v486
        %v510 = vunpack.c.l.b16 %v487
        %v511 = vunpack.c.h.b16 %v487
        %v512 = vpack.c.b16 %v506, %v504
        %v513 = vpack.c.b16 %v507, %v505
        %v514 = vpack.c.b16 %v510, %v508
        %v515 = vpack.c.b16 %v511, %v509
        %vm520 = vcmask 261120
        %v522 = vsel %vm520, %v483, 0
        %524 = vmatprep.subr.bf16.mxu0 0
        %525 = vmatpush1.bf16.msra.mxu0 0
        %526 = vmatprep.subr.bf16.mxu0 0
        %527 = vmatpush1.bf16.msra.mxu0 0
        %528 = vmatprep.subr.bf16.mxu0 0
        %529 = vmatpush1.bf16.msra.mxu0 0
        %530 = vmatprep.subr.bf16.mxu0 0
        %531 = vmatpush1.bf16.msra.mxu0 0
        %532 = vmatprep.subr.bf16.mxu0 0
        %533 = vmatpush1.bf16.msra.mxu0 0
        %534 = vmatprep.subr.bf16.mxu0 0
        %535 = vmatpush1.bf16.msra.mxu0 0
        %536 = vmatprep.subr.bf16.mxu0 %v515
        %537 = vmatpush1.bf16.msra.mxu0 %v514
        %538 = vmatprep.subr.bf16.mxu0 %v513
        %539 = vmatpush1.bf16.msra.mxu0 %v512
        %540 = vmatprep.subr.bf16.mxu0 0
        %541 = vmatpush2.bf16.msra.mxu0 0
        %542 = vmatprep.subr.bf16.mxu0 0
        %543 = vmatpush2.bf16.msra.mxu0 0
        %544 = vmatprep.subr.bf16.mxu0 0
        %545 = vmatpush2.bf16.msra.mxu0 0
        %546 = vmatprep.subr.bf16.mxu0 0
        %547 = vmatpush2.bf16.msra.mxu0 0
        %548 = vmatprep.subr.bf16.mxu0 0
        %549 = vmatpush2.bf16.msra.mxu0 0
        %550 = vmatprep.subr.bf16.mxu0 0
        %551 = vmatpush2.bf16.msra.mxu0 0
        %552 = vmatprep.subr.bf16.mxu0 0
        %553 = vmatpush2.bf16.msra.mxu0 0
        %554 = vmatprep.subr.bf16.mxu0 0
        %555 = vmatpush2.bf16.msra.mxu0 0
        %556 = vmatprep.mubr.bf16.mxu0 0
        %557 = vmatmul.mubr.bf16.gmra.mxu0 %v522
        %v558 = vpop.f32.mrf.mxu0
        %v559 = vadd.f32 %v493, %v558
        %v560 = vpop.f32.mrf.mxu0
        %v561 = vadd.f32 %v497, %v560
        %v562 = vpop.f32.mrf.mxu0
        %v563 = vpop.f32.mrf.mxu0
        %564 = vdwg.mxu0
        %v565 = vadd.f32 %v559, %v561
        %566 = vadd.xlane.f32.xlu0 %v565
        %v567 = vpop.xlane.xlu0 %566
        %v568 = vrcp.pop 256.0
        %v569 = vmul.f32 %v567, %v568
        %v570 = vsub.f32 %v559, %v569
        %v571 = vsub.f32 %v561, %v569
        %v572 = vmul.f32 %v570, %v570
        %v573 = vmul.f32 %v571, %v571
        %v574 = vadd.f32 %v572, %v573
        %575 = vadd.xlane.f32.xlu0 %v574
        %v576 = vpop.xlane.xlu0 %575
        %v577 = vmul.f32 %v576, %v568
        %v578 = vadd.f32 %v577, 1e-05
        %v579 = vrsqrt.pop %v578
        %v580 = vmul.f32 %v570, %v579
        %v581 = vmul.f32 %v571, %v579
        %v582 = vld [vmem:[%s5] sm:$0x3]
        %v584 = vlaneseq
        %v585 = vshrl.u32 %v584, 7
        %v586 = vsub.s32 0, %v585
        %v587 = vrot.slane %v582, %v586
        %v588 = vlaneseq
        %v589 = vshrl.u32 %v588, 7
        %v590 = vsub.s32 1, %v589
        %v591 = vrot.slane %v582, %v590
        %v594 = vmul.f32 %v580, %v587
        %v595 = vmul.f32 %v581, %v591
        %v596 = vld [vmem:[%s6] sm:$0x3]
        %v598 = vlaneseq
        %v599 = vshrl.u32 %v598, 7
        %v600 = vsub.s32 0, %v599
        %v601 = vrot.slane %v596, %v600
        %v602 = vlaneseq
        %v603 = vshrl.u32 %v602, 7
        %v604 = vsub.s32 1, %v603
        %v605 = vrot.slane %v596, %v604
        %v608 = vadd.f32 %v594, %v601
        %v609 = vadd.f32 %v595, %v605
        %610 = vst [vmem:[%s377] sm:$0xff] %v608
        %611 = vst [vmem:[%s377 + $0x8] sm:$0xff] %v609
        %s612 = sand.u32 %s207, 1
        %s613 = scalar_lea.sflag [#allocation5], %s612
        %s614 = sand.u32 %s207, 1
        %s615 = smul.addr %s614, 16
        %s616 = scalar_lea.vmem [#allocation10], %s615
        // Predicated region
        $region69: #{tpu_custom_call.1} parent=47 // pred_check
          %p617 = pneg %p217
        $region70: #{tpu_custom_call.1} parent=47 // pred_check_branch
          %619 = sbr.rel (%p617) target = $region72
        $region71: #{tpu_custom_call.1} parent=47 // pred_region
          %s620 = smul.u32 2, %s28
          %s622 = ssub.s32 256, 256
          %623 = vsyncadd %s613, %s622
          %s624 = smul.addr %s27, 8
          %s625 = sadd.s32 %s620, %s624
          %s626 = smul.addr %s625, 128
          %s627 = scalar_lea.hbm %s7, %s626
          %s629 = sshll.u32 %s616, 4
          %s630 = int_to_ptr.vmem [resolvable:$true] %s629
          %632 = dma.vmem_to_hbm [thread:$0]  %s630, 256, %s627, %s613
        $region72: #{tpu_custom_call.1} parent=47 // pred_fallthru
          _
      $region48: #{tpu_custom_call.1} parent=5 // pred_fallthru
        _
      %p633 = scmp.le.s32.totalorder 2, %s18
      // Predicated region
      $region73: #{tpu_custom_call.1} parent=5 // pred_check
        %p634 = pneg %p633
      $region74: #{tpu_custom_call.1} parent=5 // pred_check_branch
        %636 = sbr.rel (%p634) target = $region76
      $region75: #{tpu_custom_call.1} parent=5 // pred_region
        %s637 = ssub.s32 %s18, 2
        // Predicated region
        $region77: #{tpu_custom_call.1} parent=75 // pred_check
          %p638 = pneg %p223
        $region78: #{tpu_custom_call.1} parent=75 // pred_check_branch
          %640 = sbr.rel (%p638) target = $region80
        $region79: #{tpu_custom_call.1} parent=75 // pred_region
          %s641 = sand.u32 %s208, 1
          %s642 = scalar_lea.sflag [#allocation5], %s641
          %s643 = sand.u32 %s208, 1
          %s644 = smul.addr %s643, 16
          %s645 = scalar_lea.vmem [#allocation10], %s644
          %646 = dma.done %s642, 256
        $region80: #{tpu_custom_call.1} parent=75 // pred_fallthru
          _
      $region76: #{tpu_custom_call.1} parent=5 // pred_fallthru
        _
    $region6: #{tpu_custom_call.1} parent=1 // loop_footer
      %s22 = sadd.s32 1, %s18
    $region7: #{tpu_custom_call.1} parent=1 // loop_footer_branch
      %17 = sbr.rel target = $region3
    $region8: #{tpu_custom_call.1} parent=1 // loop_exit
      _
    %647 = vsyncpa [#allocation4], 1
    %s648 = scalar_lea.sflag [#allocation4], 1
    %649 = vsyncpa %s648, 1
    %650 = vsyncpa [#allocation7], 1
    %651 = vsyncpa [#allocation5], 1
    %s652 = scalar_lea.sflag [#allocation5], 1
    %653 = vsyncpa %s652, 1

</llo_original>
